<compile_context>
chip_gen: v7x
topology: tpu7x:2x2x1
jax: 0.10.0
libtpu: 0.0.40
codegen_flags: <defaults>
</compile_context>

<pallas_src>
import math
import functools

import jax
import jax.numpy as jnp
from jax import lax
from jax.experimental import pallas as pl
from jax.experimental.pallas import tpu as pltpu


# ---------------------------------------------------------------------------
# Parameter construction (matches PyTorch reset_parameters, deterministic)
# ---------------------------------------------------------------------------
def make_params(key, in_features, out_features, context_features, same_dim=False):
    def wn_linear_params(k, in_f, out_f):
        k1, k2 = jax.random.split(k)
        stdv = 1.0 / math.sqrt(in_f)
        direction = jax.random.uniform(k1, (out_f, in_f), jnp.float32, -stdv, stdv)
        scale = jnp.ones((out_f,), jnp.float32)          # .uniform_(1, 1) -> all ones
        bias = jax.random.uniform(k2, (out_f,), jnp.float32, -stdv, stdv)
        return direction, scale, bias

    names = ['dot_0h', 'dot_h1', 'dot_0c', 'dot_c1'] + ([] if same_dim else ['dot_01'])
    in_dims = {'dot_0h': in_features, 'dot_h1': out_features,
               'dot_0c': context_features, 'dot_c1': out_features,
               'dot_01': in_features}
    keys = jax.random.split(key, len(names))
    return {name: wn_linear_params(k, in_dims[name], out_features)
            for name, k in zip(names, keys)}


# ---------------------------------------------------------------------------
# One-time packing: fold scale (and optional weight normalization) into the
# weights, pre-transpose to K-major, and fuse the 5 linears into 2 matmuls.
# ---------------------------------------------------------------------------
def pack_params(params, in_features, out_features, context_features,
                same_dim=False, norm=False):
    # TODO(synk): WeightNormalizedLinear.mask buffer is None in the default config;
    # weight masking is not applied here.
    def eff_w_t(direction, scale):
        if norm:
            direction = direction * lax.rsqrt(
                jnp.sum(direction * direction, axis=1, keepdims=True))
        return (scale[:, None] * direction).T            # (in, out), K-major

    d0h, s0h, b0h = params['dot_0h']
    dh1, sh1, bh1 = params['dot_h1']
    d0c, s0c, b0c = params['dot_0c']
    dc1, sc1, bc1 = params['dot_c1']

    W0h = eff_w_t(d0h, s0h)                              # (in,  out)
    W0c = eff_w_t(d0c, s0c)                              # (ctx, out)
    Wh1 = eff_w_t(dh1, sh1)                              # (out, out)
    Wc1 = eff_w_t(dc1, sc1)                              # (out, out)

    split = 2 * out_features                             # relu applies to cols < split
    K1 = in_features + context_features
    N1 = split + in_features

    W1 = jnp.zeros((K1, N1), jnp.float32)
    W1 = W1.at[:in_features, :out_features].set(W0h)
    W1 = W1.at[in_features:, out_features:split].set(W0c)
    W1 = W1.at[:in_features, split:].set(jnp.eye(in_features, dtype=jnp.float32))
    b1 = jnp.concatenate(
        [b0h, b0c, jnp.zeros((in_features,), jnp.float32)])[None, :]

    if same_dim:                                         # skip path is identity
        W01 = jnp.eye(in_features, dtype=jnp.float32)
        b01 = jnp.zeros((out_features,), jnp.float32)
    else:
        d01, s01, b01 = params['dot_01']
        W01 = eff_w_t(d01, s01)                          # (in, out)

    W2 = jnp.concatenate([Wh1, Wc1, W01], axis=0)        # (2*out + in, out)
    b2 = (bh1 + bc1 + b01)[None, :]                      # (1, out)
    return W1, b1, W2, b2, split


# ---------------------------------------------------------------------------
# Pallas kernel: two MXU matmuls + one masked ReLU, everything resident in VMEM
# ---------------------------------------------------------------------------
def _ctx_res_linear_kernel(xc_ref, w1_ref, b1_ref, w2_ref, b2_ref, out_ref, *, split):
    # Stage 1: [x | ctx] @ W1 + b1  ->  columns [h_pre | c_pre | x]
    z1 = jnp.dot(xc_ref[...], w1_ref[...],
                 preferred_element_type=jnp.float32) + b1_ref[...]
    # ReLU only on the h/c columns; the trailing identity-carried x passes through.
    col = lax.broadcasted_iota(jnp.int32, z1.shape, 1)
    hcx = jnp.where(col < split, jnp.maximum(z1, 0.0), z1)
    # Stage 2: [h | c | x] @ W2 + (bh1 + bc1 + b01) == outi + outc + out_skip
    out = jnp.dot(hcx, w2_ref[...],
                  preferred_element_type=jnp.float32) + b2_ref[...]
    out_ref[...] = out.astype(out_ref.dtype)


def context_res_linear(x, ctx, packed):
    """Full ContextResLinear forward in one grid-less Pallas call (5 inputs, 2 matmuls)."""
    W1, b1, W2, b2, split = packed
    xc = jnp.concatenate([x, ctx], axis=1)               # one-time cheap wrapper concat
    batch = x.shape[0]
    out_dim = W2.shape[1]

    kernel = functools.partial(_ctx_res_linear_kernel, split=int(split))
    vmem = pltpu.MemorySpace.VMEM
    return pl.pallas_call(
        kernel,
        out_shape=jax.ShapeDtypeStruct((batch, out_dim), jnp.float32),
        in_specs=[pl.BlockSpec(memory_space=vmem)] * 5,
        out_specs=pl.BlockSpec(memory_space=vmem),
    )(xc, W1, b1, W2, b2)


# ---------------------------------------------------------------------------
# Pure-JAX reference mirroring the PyTorch forward exactly
# ---------------------------------------------------------------------------
def reference_context_res_linear(x, ctx, params, same_dim=False, norm=False):
    P = lax.Precision.HIGHEST

    def wnl(a, direction, scale, bias):
        if norm:
            direction = direction / jnp.sqrt(
                jnp.sum(direction ** 2, axis=1, keepdims=True))
        weight = scale[:, None] * direction
        return jnp.dot(a, weight.T, precision=P) + bias

    h = jax.nn.relu(wnl(x, *params['dot_0h']))
    outi = wnl(h, *params['dot_h1'])
    c = jax.nn.relu(wnl(ctx, *params['dot_0c']))
    outc = wnl(c, *params['dot_c1'])
    out_skip = x if same_dim else wnl(x, *params['dot_01'])
    return outi + outc + out_skip


# ---------------------------------------------------------------------------
if __name__ == "__main__":
    in_features, out_features, context_features = 16, 32, 8
    batch = 8

    key = jax.random.PRNGKey(0)
    kx, kc, kp = jax.random.split(key, 3)
    x = jax.random.normal(kx, (batch, in_features), jnp.float32)
    ctx = jax.random.normal(kc, (batch, context_features), jnp.float32)
    params = make_params(kp, in_features, out_features, context_features)

    packed = pack_params(params, in_features, out_features, context_features,
                         same_dim=False, norm=False)
    out = context_res_linear(x, ctx, packed)
    out = jax.block_until_ready(out)

    ref = reference_context_res_linear(x, ctx, params, same_dim=False, norm=False)
    assert out.shape == (batch, out_features)
    assert jnp.allclose(out, ref, atol=1e-4, rtol=1e-4), (out, ref)

    print("KERNEL_OK")
</pallas_src>

<mosaic_0001>
module attributes {stable_mosaic.version = 11 : i64} {
  func.func @_ctx_res_linear_kernel(%arg0: memref<8x24xf32, #tpu.memory_space<vmem>>, %arg1: memref<24x80xf32, #tpu.memory_space<vmem>>, %arg2: memref<1x80xf32, #tpu.memory_space<vmem>>, %arg3: memref<80x32xf32, #tpu.memory_space<vmem>>, %arg4: memref<1x32xf32, #tpu.memory_space<vmem>>, %arg5: memref<8x32xf32, #tpu.memory_space<vmem>>) attributes {dimension_semantics = [], scalar_prefetch = 0 : i64, scratch_operands = 0 : i64, tpu.core_type = #tpu.core_type<tc>} {
    %c0 = arith.constant 0 : index
    %c0_0 = arith.constant 0 : index
    %0 = vector.load %arg0[%c0, %c0_0] : memref<8x24xf32, #tpu.memory_space<vmem>>, vector<8x24xf32>
    %c0_1 = arith.constant 0 : index
    %c0_2 = arith.constant 0 : index
    %1 = vector.load %arg1[%c0_1, %c0_2] : memref<24x80xf32, #tpu.memory_space<vmem>>, vector<24x80xf32>
    %cst = arith.constant dense<0.000000e+00> : vector<8x80xf32>
    %2 = tpu.matmul %0, %1, %cst {dimension_numbers = #tpu.dot_dimension_numbers<[1], [0], [0], [1], [0, 0, 1, 1], [], []>} : vector<8x24xf32>, vector<24x80xf32>, vector<8x80xf32> -> vector<8x80xf32>
    %c0_3 = arith.constant 0 : index
    %c0_4 = arith.constant 0 : index
    %3 = vector.load %arg2[%c0_3, %c0_4] : memref<1x80xf32, #tpu.memory_space<vmem>>, vector<1x80xf32>
    %4 = vector.broadcast %3 : vector<1x80xf32> to vector<8x80xf32>
    %5 = arith.addf %2, %4 : vector<8x80xf32>
    %6 = tpu.iota {dimensions = array<i32: 1>} : vector<8x80xi32>
    %c64_i32 = arith.constant 64 : i32
    %7 = vector.broadcast %c64_i32 : i32 to vector<8x80xi32>
    %8 = arith.cmpi slt, %6, %7 : vector<8x80xi32>
    %cst_5 = arith.constant 0.000000e+00 : f32
    %9 = vector.broadcast %cst_5 : f32 to vector<8x80xf32>
    %10 = arith.maximumf %5, %9 : vector<8x80xf32>
    %11 = arith.select %8, %10, %5 : vector<8x80xi1>, vector<8x80xf32>
    %c0_6 = arith.constant 0 : index
    %c0_7 = arith.constant 0 : index
    %12 = vector.load %arg3[%c0_6, %c0_7] : memref<80x32xf32, #tpu.memory_space<vmem>>, vector<80x32xf32>
    %cst_8 = arith.constant dense<0.000000e+00> : vector<8x32xf32>
    %13 = tpu.matmul %11, %12, %cst_8 {dimension_numbers = #tpu.dot_dimension_numbers<[1], [0], [0], [1], [0, 0, 1, 1], [], []>} : vector<8x80xf32>, vector<80x32xf32>, vector<8x32xf32> -> vector<8x32xf32>
    %c0_9 = arith.constant 0 : index
    %c0_10 = arith.constant 0 : index
    %14 = vector.load %arg4[%c0_9, %c0_10] : memref<1x32xf32, #tpu.memory_space<vmem>>, vector<1x32xf32>
    %15 = vector.broadcast %14 : vector<1x32xf32> to vector<8x32xf32>
    %16 = arith.addf %13, %15 : vector<8x32xf32>
    %c0_11 = arith.constant 0 : index
    %c0_12 = arith.constant 0 : index
    %17 = vector.load %arg5[%c0_11, %c0_12] : memref<8x32xf32, #tpu.memory_space<vmem>>, vector<8x32xf32>
    tpu.vector_store %arg5[%c0_11, %c0_12], %16 {strides = array<i32>} : memref<8x32xf32, #tpu.memory_space<vmem>>, vector<8x32xf32>,
    return
  }
}

</mosaic_0001>

<llo_original>
// kernel: tpu_custom_call.1
$region0: #{tpu_custom_call.1}
  #allocation0 [shape = 'u32[]', space=smem, size = 0x4, offset = 0x4, fixed_abs, tag = 'smem constant byte address 0x4 - core index']
  #allocation1 [shape = 'u32[144,128]{1,0:T(1,128)}', space=vmem, size = 0x12000, scoped, tag = 'internal scratch']
  %s0 = inlined_call_operand.vmem [shape: f32[8,24], index: 0, kind: input, shape index: {}]
  %s1 = inlined_call_operand.vmem [shape: f32[24,80], index: 1, kind: input, shape index: {}]
  %s2 = inlined_call_operand.vmem [shape: f32[1,80], index: 2, kind: input, shape index: {}]
  %s3 = inlined_call_operand.vmem [shape: f32[80,32], index: 3, kind: input, shape index: {}]
  %s4 = inlined_call_operand.vmem [shape: f32[1,32], index: 4, kind: input, shape index: {}]
  %s5 = inlined_call_operand.hbm [shape: f32[8,32], index: 5, kind: output, shape index: {}]
  %s6 = sld [smem:[#allocation0]]
  $region30: #{tpu_custom_call.1} parent=0
    _
  %s8 = ssub.s32 1, %s6
  %s9 = scalar_select 0, %s8, %s6
  $region1: #{tpu_custom_call.1} parent=0
    #allocation2 [shape = 'u8[4096]{0}', space=vmem, size = 0x1000, scoped, tag = 'output window, operand 0, single buffered']
    #allocation3 [shape = 's32[1]{0}', space=sflag, size = 0x4, scoped, tag = 'scoped memory for tpu_custom_call.1']
    %10 = vsyncpa [#allocation3], 0
    // Predicated region
    $region2: #{tpu_custom_call.1} parent=1 // pred_check
      _
    $region3: #{tpu_custom_call.1} parent=1 // pred_check_branch
      %12 = sbr.rel (0) target = $region5
    $region4: #{tpu_custom_call.1} parent=1 // pred_region
      _
    $region5: #{tpu_custom_call.1} parent=1 // pred_fallthru
      _
    // Predicated region
    $region6: #{tpu_custom_call.1} parent=1 // pred_check
      _
    $region7: #{tpu_custom_call.1} parent=1 // pred_check_branch
      %14 = sbr.rel (0) target = $region9
    $region8: #{tpu_custom_call.1} parent=1 // pred_region
      _
    $region9: #{tpu_custom_call.1} parent=1 // pred_fallthru
      _
    // Predicated region
    $region10: #{tpu_custom_call.1} parent=1 // pred_check
      _
    $region11: #{tpu_custom_call.1} parent=1 // pred_check_branch
      %16 = sbr.rel (0) target = $region13
    $region12: #{tpu_custom_call.1} parent=1 // pred_region
      _
    $region13: #{tpu_custom_call.1} parent=1 // pred_fallthru
      _
    // Predicated region
    $region14: #{tpu_custom_call.1} parent=1 // pred_check
      _
    $region15: #{tpu_custom_call.1} parent=1 // pred_check_branch
      %18 = sbr.rel (0) target = $region17
    $region16: #{tpu_custom_call.1} parent=1 // pred_region
      _
    $region17: #{tpu_custom_call.1} parent=1 // pred_fallthru
      _
    // Predicated region
    $region18: #{tpu_custom_call.1} parent=1 // pred_check
      _
    $region19: #{tpu_custom_call.1} parent=1 // pred_check_branch
      %20 = sbr.rel (0) target = $region21
    $region20: #{tpu_custom_call.1} parent=1 // pred_region
      _
    $region21: #{tpu_custom_call.1} parent=1 // pred_fallthru
      _
    %v21 = vld [vmem:[%s0] sm:$0xff]
    %v22 = vld [vmem:[%s1] sm:$0xff]
    %v23 = vld [vmem:[%s1 + $0x8] sm:$0xff]
    %v24 = vld [vmem:[%s1 + $0x10] sm:$0xff]
    %v25 = vld [vmem:[%s2] sm:$0x1]
    %v27 = vlaneseq
    %v28 = vshrl.u32 %v27, 7
    %v29 = vsub.s32 0, %v28
    %v30 = vrot.slane %v25, %v29
    %vm32 = vcmask 195584
    %v34 = vsel %vm32, %v21, 0
    %36 = vmatprep.subr.mxu0 0.0
    %37 = vmatpush1.msra.mxu0 %v22
    %38 = vmatprep.subr.mxu0 0.0
    %39 = vmatpush1.msra.mxu0 %v23
    %40 = vmatprep.subr.mxu0 0.0
    %41 = vmatpush1.msra.mxu0 %v24
    %42 = vmatprep.subr.mxu0 0.0
    %43 = vmatpush1.msra.mxu0 0.0
    %44 = vmatprep.subr.mxu0 0.0
    %45 = vmatpush1.msra.mxu0 0.0
    %46 = vmatprep.subr.mxu0 0.0
    %47 = vmatpush1.msra.mxu0 0.0
    %48 = vmatprep.subr.mxu0 0.0
    %49 = vmatpush1.msra.mxu0 0.0
    %50 = vmatprep.subr.mxu0 0.0
    %51 = vmatpush1.msra.mxu0 0.0
    %52 = vmatprep.subr.mxu0 0.0
    %53 = vmatpush1.msra.mxu0 0.0
    %54 = vmatprep.subr.mxu0 0.0
    %55 = vmatpush1.msra.mxu0 0.0
    %56 = vmatprep.subr.mxu0 0.0
    %57 = vmatpush1.msra.mxu0 0.0
    %58 = vmatprep.subr.mxu0 0.0
    %59 = vmatpush1.msra.mxu0 0.0
    %60 = vmatprep.subr.mxu0 0.0
    %61 = vmatpush1.msra.mxu0 0.0
    %62 = vmatprep.subr.mxu0 0.0
    %63 = vmatpush1.msra.mxu0 0.0
    %64 = vmatprep.subr.mxu0 0.0
    %65 = vmatpush1.msra.mxu0 0.0
    %66 = vmatprep.subr.mxu0 0.0
    %67 = vmatpush1.msra.mxu0 0.0
    %68 = vmatprep.subr.mxu0 0.0
    %69 = vmatpush1.msra.mxu0 0.0
    %70 = vmatprep.subr.mxu0 0.0
    %71 = vmatpush1.msra.mxu0 0.0
    %72 = vmatprep.subr.mxu0 0.0
    %73 = vmatpush1.msra.mxu0 0.0
    %74 = vmatprep.subr.mxu0 0.0
    %75 = vmatpush1.msra.mxu0 0.0
    %76 = vmatprep.subr.mxu0 0.0
    %77 = vmatpush1.msra.mxu0 0.0
    %78 = vmatprep.subr.mxu0 0.0
    %79 = vmatpush1.msra.mxu0 0.0
    %80 = vmatprep.subr.mxu0 0.0
    %81 = vmatpush1.msra.mxu0 0.0
    %82 = vmatprep.subr.mxu0 0.0
    %83 = vmatpush1.msra.mxu0 0.0
    %84 = vmatprep.subr.mxu0 0.0
    %85 = vmatpush1.msra.mxu0 0.0
    %86 = vmatprep.subr.mxu0 0.0
    %87 = vmatpush1.msra.mxu0 0.0
    %88 = vmatprep.subr.mxu0 0.0
    %89 = vmatpush1.msra.mxu0 0.0
    %90 = vmatprep.subr.mxu0 0.0
    %91 = vmatpush1.msra.mxu0 0.0
    %92 = vmatprep.subr.mxu0 0.0
    %93 = vmatpush1.msra.mxu0 0.0
    %94 = vmatprep.subr.mxu0 0.0
    %95 = vmatpush1.msra.mxu0 0.0
    %96 = vmatprep.subr.mxu0 0.0
    %97 = vmatpush1.msra.mxu0 0.0
    %98 = vmatprep.subr.mxu0 0.0
    %99 = vmatpush1.msra.mxu0 0.0
    %100 = vmatprep.mubr.f32.mxu0 0.0
    %101 = vmatmul.mubr.f32.gmra.mrb[0].mxu0 %v34
    %v102 = vpop.f32.mrb[0].mxu0
    %v103 = vadd.f32 %v30, %v102
    %v104 = vpop.f32.mrb[0].mxu0
    %105 = vdwg.mxu0
    %v106 = vlaneseq
    %v107 = vand.u32 %v106, 127
    %vm108 = vcmp.lt.s32.totalorder %v107, 64
    %v109 = vmax.f32 %v103, 0.0
    %v110 = vsel %vm108, %v109, %v103
    %v111 = vld [vmem:[%s3] sm:$0xff]
    %v112 = vld [vmem:[%s3 + $0x8] sm:$0xff]
    %v113 = vld [vmem:[%s3 + $0x10] sm:$0xff]
    %v114 = vld [vmem:[%s3 + $0x18] sm:$0xff]
    %v115 = vld [vmem:[%s3 + $0x20] sm:$0xff]
    %v116 = vld [vmem:[%s3 + $0x28] sm:$0xff]
    %v117 = vld [vmem:[%s3 + $0x30] sm:$0xff]
    %v118 = vld [vmem:[%s3 + $0x38] sm:$0xff]
    %v119 = vld [vmem:[%s3 + $0x40] sm:$0xff]
    %v120 = vld [vmem:[%s3 + $0x48] sm:$0xff]
    %v121 = vld [vmem:[%s4] sm:$0x1]
    %v123 = vlaneseq
    %v124 = vshrl.u32 %v123, 7
    %v125 = vsub.s32 0, %v124
    %v126 = vrot.slane %v121, %v125
    %vm128 = vcmask 654336
    %v130 = vsel %vm128, %v110, 0
    %132 = vmatprep.subr.mxu0 0.0
    %133 = vmatpush1.msra.mxu0 %v111
    %134 = vmatprep.subr.mxu0 0.0
    %135 = vmatpush1.msra.mxu0 %v112
    %136 = vmatprep.subr.mxu0 0.0
    %137 = vmatpush1.msra.mxu0 %v113
    %138 = vmatprep.subr.mxu0 0.0
    %139 = vmatpush1.msra.mxu0 %v114
    %140 = vmatprep.subr.mxu0 0.0
    %141 = vmatpush1.msra.mxu0 %v115
    %142 = vmatprep.subr.mxu0 0.0
    %143 = vmatpush1.msra.mxu0 %v116
    %144 = vmatprep.subr.mxu0 0.0
    %145 = vmatpush1.msra.mxu0 %v117
    %146 = vmatprep.subr.mxu0 0.0
    %147 = vmatpush1.msra.mxu0 %v118
    %148 = vmatprep.subr.mxu0 0.0
    %149 = vmatpush1.msra.mxu0 %v119
    %150 = vmatprep.subr.mxu0 0.0
    %151 = vmatpush1.msra.mxu0 %v120
    %152 = vmatprep.subr.mxu0 0.0
    %153 = vmatpush1.msra.mxu0 0.0
    %154 = vmatprep.subr.mxu0 0.0
    %155 = vmatpush1.msra.mxu0 0.0
    %156 = vmatprep.subr.mxu0 0.0
    %157 = vmatpush1.msra.mxu0 0.0
    %158 = vmatprep.subr.mxu0 0.0
    %159 = vmatpush1.msra.mxu0 0.0
    %160 = vmatprep.subr.mxu0 0.0
    %161 = vmatpush1.msra.mxu0 0.0
    %162 = vmatprep.subr.mxu0 0.0
    %163 = vmatpush1.msra.mxu0 0.0
    %164 = vmatprep.subr.mxu0 0.0
    %165 = vmatpush1.msra.mxu0 0.0
    %166 = vmatprep.subr.mxu0 0.0
    %167 = vmatpush1.msra.mxu0 0.0
    %168 = vmatprep.subr.mxu0 0.0
    %169 = vmatpush1.msra.mxu0 0.0
    %170 = vmatprep.subr.mxu0 0.0
    %171 = vmatpush1.msra.mxu0 0.0
    %172 = vmatprep.subr.mxu0 0.0
    %173 = vmatpush1.msra.mxu0 0.0
    %174 = vmatprep.subr.mxu0 0.0
    %175 = vmatpush1.msra.mxu0 0.0
    %176 = vmatprep.subr.mxu0 0.0
    %177 = vmatpush1.msra.mxu0 0.0
    %178 = vmatprep.subr.mxu0 0.0
    %179 = vmatpush1.msra.mxu0 0.0
    %180 = vmatprep.subr.mxu0 0.0
    %181 = vmatpush1.msra.mxu0 0.0
    %182 = vmatprep.subr.mxu0 0.0
    %183 = vmatpush1.msra.mxu0 0.0
    %184 = vmatprep.subr.mxu0 0.0
    %185 = vmatpush1.msra.mxu0 0.0
    %186 = vmatprep.subr.mxu0 0.0
    %187 = vmatpush1.msra.mxu0 0.0
    %188 = vmatprep.subr.mxu0 0.0
    %189 = vmatpush1.msra.mxu0 0.0
    %190 = vmatprep.subr.mxu0 0.0
    %191 = vmatpush1.msra.mxu0 0.0
    %192 = vmatprep.subr.mxu0 0.0
    %193 = vmatpush1.msra.mxu0 0.0
    %194 = vmatprep.subr.mxu0 0.0
    %195 = vmatpush1.msra.mxu0 0.0
    %196 = vmatprep.mubr.f32.mxu0 0.0
    %197 = vmatmul.mubr.f32.gmra.mrb[0].mxu0 %v130
    %v198 = vpop.f32.mrb[0].mxu0
    %v199 = vadd.f32 %v126, %v198
    %v200 = vpop.f32.mrb[0].mxu0
    %201 = vdwg.mxu0
    %vm202 = vcmask 261120
    %203 = vst.msk [vmem:[#allocation2] sm:$0xff] %vm202, %v199
    // Predicated region
    $region22: #{tpu_custom_call.1} parent=1 // pred_check
      _
    $region23: #{tpu_custom_call.1} parent=1 // pred_check_branch
      %205 = sbr.rel (0) target = $region25
    $region24: #{tpu_custom_call.1} parent=1 // pred_region
      %s207 = ssub.s32 128, 128
      %208 = vsyncadd [#allocation3], %s207
      %s210 = sshll.u32 [#allocation2], 4
      %s211 = int_to_ptr.vmem [resolvable:$true] %s210
      %213 = dma.vmem_to_hbm [thread:$0]  %s211, 128, %s5, [#allocation3]
    $region25: #{tpu_custom_call.1} parent=1 // pred_fallthru
      _
    // Predicated region
    $region26: #{tpu_custom_call.1} parent=1 // pred_check
      _
    $region27: #{tpu_custom_call.1} parent=1 // pred_check_branch
      %215 = sbr.rel (0) target = $region29
    $region28: #{tpu_custom_call.1} parent=1 // pred_region
      %216 = dma.done [#allocation3], 128
    $region29: #{tpu_custom_call.1} parent=1 // pred_fallthru
      _
    %217 = vsyncpa [#allocation3], 1

</llo_original>
